<compile_context>
chip_gen: v7x
topology: tpu7x:2x2x1
jax: 0.10.0
libtpu: 0.0.40
codegen_flags: <defaults>
</compile_context>

<pallas_src>
import functools
import math

import jax
import jax.numpy as jnp
from jax import lax
from jax.experimental import pallas as pl
from jax.experimental.pallas import tpu as pltpu


def _round_up(x, m):
    return ((x + m - 1) // m) * m


# ----------------------------- prologue: QKV projection ----------------------
def _qkv_projection_kernel(x_ref, wq_ref, wk_ref, wv_ref,
                           q_ref, k_ref, v_ref, *, scale):
    x = x_ref[...]
    q = jnp.dot(x, wq_ref[...], preferred_element_type=jnp.float32)
    # Fold 1/sqrt(d_out) into Q (S*d_out elems) instead of the (S,S) scores.
    q_ref[...] = (q * scale).astype(q_ref.dtype)
    k_ref[...] = jnp.dot(x, wk_ref[...],
                         preferred_element_type=jnp.float32).astype(k_ref.dtype)
    v_ref[...] = jnp.dot(x, wv_ref[...],
                         preferred_element_type=jnp.float32).astype(v_ref.dtype)


# ----------------------------- flash attention -------------------------------
def _flash_attention_kernel(q_ref, k_ref, v_ref, o_ref,
                            m_scr, l_scr, acc_scr,
                            *, seq_len, block_k, num_full_k_blocks,
                            needs_mask, approx_recip):
    ki = pl.program_id(1)

    @pl.when(ki == 0)
    def _init():
        m_scr[...] = jnp.full_like(m_scr, -1e30)
        l_scr[...] = jnp.zeros_like(l_scr)
        acc_scr[...] = jnp.zeros_like(acc_scr)

    # scores = q @ k^T without materializing k.T: contract last axis of both.
    s = lax.dot_general(
        q_ref[...], k_ref[...],
        dimension_numbers=(((1,), (1,)), ((), ())),
        preferred_element_type=jnp.float32,
    )  # (block_q, block_k), f32

    if needs_mask:
        # Only the partial / fully-padded tail key blocks pay for the mask.
        def _mask(scores):
            key_idx = lax.broadcasted_iota(jnp.int32, scores.shape, 1) + ki * block_k
            return jnp.where(key_idx < seq_len, scores, -1e30)

        s = lax.cond(ki >= num_full_k_blocks, _mask, lambda t: t, s)

    # Online-softmax update (f32 elementwise; MXU input cast to v dtype).
    m_prev = m_scr[...]
    m_new = jnp.maximum(m_prev, jnp.max(s, axis=-1, keepdims=True))
    alpha = jnp.exp(m_prev - m_new)
    p = jnp.exp(s - m_new)
    l_scr[...] = alpha * l_scr[...] + jnp.sum(p, axis=-1, keepdims=True)
    acc_scr[...] = alpha * acc_scr[...] + jnp.dot(
        p.astype(v_ref.dtype), v_ref[...], preferred_element_type=jnp.float32)
    m_scr[...] = m_new

    @pl.when(ki == pl.num_programs(1) - 1)
    def _finalize():
        inv_l = pl.reciprocal(l_scr[...], approx=approx_recip)
        o_ref[...] = (acc_scr[...] * inv_l).astype(o_ref.dtype)


# ----------------------------- wrapper ---------------------------------------
def self_attention_v2(x, w_query, w_key, w_value, *,
                      block_q=256, block_k=512,
                      compute_dtype=jnp.bfloat16):
    """SelfAttention_v2 forward.

    x: (S, d_in); w_*: (d_in, d_out) == nn.Linear.weight.T (no bias).
    Returns (S, d_out) in x.dtype.
    """
    assert block_q % 128 == 0 and block_k % 128 == 0
    S, d_in = x.shape
    d_out = w_query.shape[1]
    out_dtype = x.dtype

    # keys.shape[-1] ** 0.5 in the PyTorch module == sqrt(original d_out).
    scale = 1.0 / math.sqrt(d_out)

    d_in_p = _round_up(d_in, 8)       # sublane-align only; do NOT pad to 128
    d_out_p = _round_up(d_out, 128)   # lane-dense scores / output stores

    # Sequence tiling: guarantee bq | s_p and bk | s_p (tail padding only).
    s_p = _round_up(S, 128)
    bq = min(block_q, s_p)
    s_p = _round_up(S, bq)
    bk = min(block_k, s_p)
    while s_p % bk:
        bk -= 128
    nq, nk = s_p // bq, s_p // bk

    xp = jnp.zeros((s_p, d_in_p), compute_dtype).at[:S, :d_in].set(
        x.astype(compute_dtype))

    def pad_w(w):
        return jnp.zeros((d_in_p, d_out_p), compute_dtype).at[:d_in, :d_out].set(
            w.astype(compute_dtype))

    wqp, wkp, wvp = pad_w(w_query), pad_w(w_key), pad_w(w_value)

    # ---- Pass 1: project Q (pre-scaled), K, V exactly once. -----------------
    q, k, v = pl.pallas_call(
        functools.partial(_qkv_projection_kernel, scale=scale),
        out_shape=tuple(jax.ShapeDtypeStruct((s_p, d_out_p), compute_dtype)
                        for _ in range(3)),
        grid_spec=pltpu.PrefetchScalarGridSpec(
            num_scalar_prefetch=0,
            grid=(nq,),
            in_specs=[
                pl.BlockSpec((bq, d_in_p), lambda i: (i, 0)),       # x rows
                pl.BlockSpec((d_in_p, d_out_p), lambda i: (0, 0)),  # W_query
                pl.BlockSpec((d_in_p, d_out_p), lambda i: (0, 0)),  # W_key
                pl.BlockSpec((d_in_p, d_out_p), lambda i: (0, 0)),  # W_value
            ],
            out_specs=[
                pl.BlockSpec((bq, d_out_p), lambda i: (i, 0)),
                pl.BlockSpec((bq, d_out_p), lambda i: (i, 0)),
                pl.BlockSpec((bq, d_out_p), lambda i: (i, 0)),
            ],
        ),
        compiler_params=pltpu.CompilerParams(dimension_semantics=("parallel",)),
    )(xp, wqp, wkp, wvp)

    # ---- Pass 2: flash attention over (query tile, key tile). ---------------
    kernel = functools.partial(
        _flash_attention_kernel,
        seq_len=S,
        block_k=bk,
        num_full_k_blocks=S // bk,
        needs_mask=(s_p != S),
        approx_recip=(jnp.dtype(compute_dtype) != jnp.dtype(jnp.float32)),
    )

    out_padded = pl.pallas_call(
        kernel,
        out_shape=jax.ShapeDtypeStruct((s_p, d_out_p), out_dtype),
        grid_spec=pltpu.PrefetchScalarGridSpec(
            num_scalar_prefetch=0,
            grid=(nq, nk),
            in_specs=[
                pl.BlockSpec((bq, d_out_p), lambda qi, ki: (qi, 0)),  # Q tile
                pl.BlockSpec((bk, d_out_p), lambda qi, ki: (ki, 0)),  # K tile
                pl.BlockSpec((bk, d_out_p), lambda qi, ki: (ki, 0)),  # V tile
            ],
            out_specs=pl.BlockSpec((bq, d_out_p), lambda qi, ki: (qi, 0)),
            scratch_shapes=[
                pltpu.VMEM((bq, 1), jnp.float32),        # running max
                pltpu.VMEM((bq, 1), jnp.float32),        # running denom
                pltpu.VMEM((bq, d_out_p), jnp.float32),  # accumulator
            ],
        ),
        compiler_params=pltpu.CompilerParams(
            dimension_semantics=("parallel", "arbitrary")),
    )(q, k, v)

    return out_padded[:S, :d_out]


# --------------------------- references (pure JAX) ---------------------------
def reference_f32(x, wq, wk, wv):
    """Exact f32 semantics of the PyTorch module."""
    q, k, v = x @ wq, x @ wk, x @ wv
    s = (q @ k.T) / jnp.sqrt(jnp.float32(wq.shape[1]))
    return jax.nn.softmax(s, axis=-1) @ v


def reference_matched(x, wq, wk, wv, compute_dtype):
    """Same math with the kernel's compute-dtype casts (for bf16 comparison)."""
    d_out = wq.shape[1]
    xc = x.astype(compute_dtype)
    q = jnp.dot(xc, wq.astype(compute_dtype), preferred_element_type=jnp.float32)
    k = jnp.dot(xc, wk.astype(compute_dtype), preferred_element_type=jnp.float32)
    v = jnp.dot(xc, wv.astype(compute_dtype), preferred_element_type=jnp.float32)
    q = (q * (1.0 / jnp.sqrt(jnp.float32(d_out)))).astype(compute_dtype)
    k = k.astype(compute_dtype)
    v = v.astype(compute_dtype)
    s = lax.dot_general(q, k, (((1,), (1,)), ((), ())),
                        preferred_element_type=jnp.float32)
    m = jnp.max(s, axis=-1, keepdims=True)
    p = jnp.exp(s - m)
    l = jnp.sum(p, axis=-1, keepdims=True)
    return jnp.dot(p.astype(compute_dtype), v,
                   preferred_element_type=jnp.float32) / l


if __name__ == "__main__":
    # ---- Test 1: the exact PyTorch example (seq=6, d_in=3, d_out=2), f32 path.
    x_small = jnp.array(
        [[0.43, 0.15, 0.89],
         [0.55, 0.87, 0.66],
         [0.55, 0.87, 0.66],
         [0.22, 0.58, 0.33],
         [0.77, 0.25, 0.10],
         [0.05, 0.80, 0.55]],
        dtype=jnp.float32,
    )
    d_in, d_out = 3, 2
    key = jax.random.PRNGKey(0)
    kq, kk, kv, kx = jax.random.split(key, 4)
    bound = 1.0 / math.sqrt(d_in)
    wq_s = jax.random.uniform(kq, (d_in, d_out), jnp.float32, -bound, bound)
    wk_s = jax.random.uniform(kk, (d_in, d_out), jnp.float32, -bound, bound)
    wv_s = jax.random.uniform(kv, (d_in, d_out), jnp.float32, -bound, bound)

    out_small = jax.block_until_ready(
        self_attention_v2(x_small, wq_s, wk_s, wv_s, compute_dtype=jnp.float32))
    ref_small = reference_f32(x_small, wq_s, wk_s, wv_s)
    assert out_small.shape == (6, 2)
    assert jnp.allclose(out_small, ref_small, rtol=5e-3, atol=1e-3), (
        "small f32 mismatch")

    # ---- Test 2: seq=300, d_in=64, d_out=96, bf16 MXU path; exercises tail
    # padding, the gated key mask and the multi-query-tile grid (nq=2).
    S2, d_in2, d_out2 = 300, 64, 96
    k1, k2, k3, k4 = jax.random.split(kx, 4)
    bound2 = 1.0 / math.sqrt(d_in2)
    x_big = jax.random.uniform(k1, (S2, d_in2), jnp.float32, 0.0, 1.0)
    wq_b = jax.random.uniform(k2, (d_in2, d_out2), jnp.float32, -bound2, bound2)
    wk_b = jax.random.uniform(k3, (d_in2, d_out2), jnp.float32, -bound2, bound2)
    wv_b = jax.random.uniform(k4, (d_in2, d_out2), jnp.float32, -bound2, bound2)

    out_big = jax.block_until_ready(
        self_attention_v2(x_big, wq_b, wk_b, wv_b,
                          block_q=256, block_k=512,
                          compute_dtype=jnp.bfloat16))
    ref_big = reference_matched(x_big, wq_b, wk_b, wv_b, jnp.bfloat16)
    assert out_big.shape == (S2, d_out2)
    assert jnp.allclose(out_big, ref_big, rtol=1e-2, atol=5e-3), (
        "large bf16 mismatch")

    print("KERNEL_OK")
</pallas_src>

<mosaic_0001>
module attributes {stable_mosaic.version = 11 : i64} {
  func.func @_qkv_projection_kernel(%arg0: i32, %arg1: memref<128x8xf32, #tpu.memory_space<vmem>>, %arg2: memref<8x128xf32, #tpu.memory_space<vmem>>, %arg3: memref<8x128xf32, #tpu.memory_space<vmem>>, %arg4: memref<8x128xf32, #tpu.memory_space<vmem>>, %arg5: memref<128x128xf32, #tpu.memory_space<vmem>>, %arg6: memref<128x128xf32, #tpu.memory_space<vmem>>, %arg7: memref<128x128xf32, #tpu.memory_space<vmem>>) attributes {dimension_semantics = [#tpu.dimension_semantics<parallel>], iteration_bounds = array<i64: 1>, scalar_prefetch = 0 : i64, scratch_operands = 0 : i64, tpu.core_type = #tpu.core_type<tc>, window_params = [{transform_indices = @transform_0, window_bounds = array<i64: 128, 8>}, {pipeline_mode = #tpu.pipeline_mode<synchronous>, transform_indices = @transform_1, window_bounds = array<i64: 8, 128>}, {pipeline_mode = #tpu.pipeline_mode<synchronous>, transform_indices = @transform_2, window_bounds = array<i64: 8, 128>}, {pipeline_mode = #tpu.pipeline_mode<synchronous>, transform_indices = @transform_3, window_bounds = array<i64: 8, 128>}, {transform_indices = @transform_4, window_bounds = array<i64: 128, 128>}, {transform_indices = @transform_5, window_bounds = array<i64: 128, 128>}, {transform_indices = @transform_6, window_bounds = array<i64: 128, 128>}]} {
    %c0 = arith.constant 0 : index
    %c0_0 = arith.constant 0 : index
    %0 = vector.load %arg1[%c0, %c0_0] : memref<128x8xf32, #tpu.memory_space<vmem>>, vector<128x8xf32>
    %c0_1 = arith.constant 0 : index
    %c0_2 = arith.constant 0 : index
    %1 = vector.load %arg2[%c0_1, %c0_2] : memref<8x128xf32, #tpu.memory_space<vmem>>, vector<8x128xf32>
    %cst = arith.constant dense<0.000000e+00> : vector<128x128xf32>
    %2 = tpu.matmul %0, %1, %cst {dimension_numbers = #tpu.dot_dimension_numbers<[1], [0], [0], [1], [0, 0, 1, 1], [], []>} : vector<128x8xf32>, vector<8x128xf32>, vector<128x128xf32> -> vector<128x128xf32>
    %cst_3 = arith.constant 0.707106769 : f32
    %3 = vector.broadcast %cst_3 : f32 to vector<128x128xf32>
    %4 = arith.mulf %2, %3 : vector<128x128xf32>
    %c0_4 = arith.constant 0 : index
    %c0_5 = arith.constant 0 : index
    %5 = vector.load %arg5[%c0_4, %c0_5] : memref<128x128xf32, #tpu.memory_space<vmem>>, vector<128x128xf32>
    tpu.vector_store %arg5[%c0_4, %c0_5], %4 {strides = array<i32>} : memref<128x128xf32, #tpu.memory_space<vmem>>, vector<128x128xf32>,
    %c0_6 = arith.constant 0 : index
    %c0_7 = arith.constant 0 : index
    %6 = vector.load %arg3[%c0_6, %c0_7] : memref<8x128xf32, #tpu.memory_space<vmem>>, vector<8x128xf32>
    %cst_8 = arith.constant dense<0.000000e+00> : vector<128x128xf32>
    %7 = tpu.matmul %0, %6, %cst_8 {dimension_numbers = #tpu.dot_dimension_numbers<[1], [0], [0], [1], [0, 0, 1, 1], [], []>} : vector<128x8xf32>, vector<8x128xf32>, vector<128x128xf32> -> vector<128x128xf32>
    %c0_9 = arith.constant 0 : index
    %c0_10 = arith.constant 0 : index
    %8 = vector.load %arg6[%c0_9, %c0_10] : memref<128x128xf32, #tpu.memory_space<vmem>>, vector<128x128xf32>
    tpu.vector_store %arg6[%c0_9, %c0_10], %7 {strides = array<i32>} : memref<128x128xf32, #tpu.memory_space<vmem>>, vector<128x128xf32>,
    %c0_11 = arith.constant 0 : index
    %c0_12 = arith.constant 0 : index
    %9 = vector.load %arg4[%c0_11, %c0_12] : memref<8x128xf32, #tpu.memory_space<vmem>>, vector<8x128xf32>
    %cst_13 = arith.constant dense<0.000000e+00> : vector<128x128xf32>
    %10 = tpu.matmul %0, %9, %cst_13 {dimension_numbers = #tpu.dot_dimension_numbers<[1], [0], [0], [1], [0, 0, 1, 1], [], []>} : vector<128x8xf32>, vector<8x128xf32>, vector<128x128xf32> -> vector<128x128xf32>
    %c0_14 = arith.constant 0 : index
    %c0_15 = arith.constant 0 : index
    %11 = vector.load %arg7[%c0_14, %c0_15] : memref<128x128xf32, #tpu.memory_space<vmem>>, vector<128x128xf32>
    tpu.vector_store %arg7[%c0_14, %c0_15], %10 {strides = array<i32>} : memref<128x128xf32, #tpu.memory_space<vmem>>, vector<128x128xf32>,
    return
  }
  func.func @transform_0(%arg0: i32) -> (i32, i32) {
    %c0_i32 = arith.constant 0 : i32
    %c0_i32_0 = arith.constant 0 : i32
    return %arg0, %c0_i32 : i32, i32
  }
  func.func @transform_1(%arg0: i32) -> (i32, i32) {
    %c0_i32 = arith.constant 0 : i32
    %c0_i32_0 = arith.constant 0 : i32
    %c0_i32_1 = arith.constant 0 : i32
    return %c0_i32, %c0_i32_0 : i32, i32
  }
  func.func @transform_2(%arg0: i32) -> (i32, i32) {
    %c0_i32 = arith.constant 0 : i32
    %c0_i32_0 = arith.constant 0 : i32
    %c0_i32_1 = arith.constant 0 : i32
    return %c0_i32, %c0_i32_0 : i32, i32
  }
  func.func @transform_3(%arg0: i32) -> (i32, i32) {
    %c0_i32 = arith.constant 0 : i32
    %c0_i32_0 = arith.constant 0 : i32
    %c0_i32_1 = arith.constant 0 : i32
    return %c0_i32, %c0_i32_0 : i32, i32
  }
  func.func @transform_4(%arg0: i32) -> (i32, i32) {
    %c0_i32 = arith.constant 0 : i32
    %c0_i32_0 = arith.constant 0 : i32
    return %arg0, %c0_i32 : i32, i32
  }
  func.func @transform_5(%arg0: i32) -> (i32, i32) {
    %c0_i32 = arith.constant 0 : i32
    %c0_i32_0 = arith.constant 0 : i32
    return %arg0, %c0_i32 : i32, i32
  }
  func.func @transform_6(%arg0: i32) -> (i32, i32) {
    %c0_i32 = arith.constant 0 : i32
    %c0_i32_0 = arith.constant 0 : i32
    return %arg0, %c0_i32 : i32, i32
  }
}

</mosaic_0001>

<llo_original>
// kernel: tpu_custom_call.1
$region0: #{tpu_custom_call.1}
  #allocation0 [shape = 'u32[]', space=smem, size = 0x4, offset = 0x4, fixed_abs, tag = 'smem constant byte address 0x4 - core index']
  #allocation1 [shape = 'u32[144,128]{1,0:T(1,128)}', space=vmem, size = 0x12000, scoped, tag = 'internal scratch']
  %s0 = inlined_call_operand.vmem [shape: f32[128,8], index: 0, kind: input, shape index: {}]
  %s1 = inlined_call_operand.vmem [shape: f32[8,128], index: 1, kind: input, shape index: {}]
  %s2 = inlined_call_operand.vmem [shape: f32[8,128], index: 2, kind: input, shape index: {}]
  %s3 = inlined_call_operand.vmem [shape: f32[8,128], index: 3, kind: input, shape index: {}]
  %s4 = inlined_call_operand.hbm [shape: f32[128,128], index: 4, kind: output, shape index: {0}]
  %s5 = inlined_call_operand.hbm [shape: f32[128,128], index: 5, kind: output, shape index: {1}]
  %s6 = inlined_call_operand.hbm [shape: f32[128,128], index: 6, kind: output, shape index: {2}]
  %7 = xla_tuple %s4, %s5, %s6
  %s8 = sld [smem:[#allocation0]]
  $region42: #{tpu_custom_call.1} parent=0
    _
  %s10 = ssub.s32 1, %s8
  %s11 = scalar_select 0, %s10, %s8
  $region1: #{tpu_custom_call.1} parent=0
    #allocation2 [shape = 'u8[65536]{0}', space=vmem, size = 0x10000, scoped, tag = 'output window, operand 0, single buffered']
    #allocation3 [shape = 's32[1]{0}', space=sflag, size = 0x4, scoped, tag = 'scoped memory for tpu_custom_call.1']
    #allocation4 [shape = 'u8[65536]{0}', space=vmem, size = 0x10000, scoped, tag = 'output window, operand 1, single buffered']
    #allocation5 [shape = 's32[1]{0}', space=sflag, size = 0x4, scoped, tag = 'scoped memory for tpu_custom_call.1']
    #allocation6 [shape = 'u8[65536]{0}', space=vmem, size = 0x10000, scoped, tag = 'output window, operand 2, single buffered']
    %12 = vsyncpa [#allocation3], 0
    %13 = vsyncpa [#allocation5], 0
    // Predicated region
    $region2: #{tpu_custom_call.1} parent=1 // pred_check
      _
    $region3: #{tpu_custom_call.1} parent=1 // pred_check_branch
      %15 = sbr.rel (0) target = $region5
    $region4: #{tpu_custom_call.1} parent=1 // pred_region
      _
    $region5: #{tpu_custom_call.1} parent=1 // pred_fallthru
      _
    // Predicated region
    $region6: #{tpu_custom_call.1} parent=1 // pred_check
      _
    $region7: #{tpu_custom_call.1} parent=1 // pred_check_branch
      %17 = sbr.rel (0) target = $region9
    $region8: #{tpu_custom_call.1} parent=1 // pred_region
      _
    $region9: #{tpu_custom_call.1} parent=1 // pred_fallthru
      _
    // Predicated region
    $region10: #{tpu_custom_call.1} parent=1 // pred_check
      _
    $region11: #{tpu_custom_call.1} parent=1 // pred_check_branch
      %19 = sbr.rel (0) target = $region13
    $region12: #{tpu_custom_call.1} parent=1 // pred_region
      _
    $region13: #{tpu_custom_call.1} parent=1 // pred_fallthru
      _
    // Predicated region
    $region14: #{tpu_custom_call.1} parent=1 // pred_check
      _
    $region15: #{tpu_custom_call.1} parent=1 // pred_check_branch
      %21 = sbr.rel (0) target = $region17
    $region16: #{tpu_custom_call.1} parent=1 // pred_region
      _
    $region17: #{tpu_custom_call.1} parent=1 // pred_fallthru
      _
    %v22 = vld [vmem:[%s0] sm:$0xff]
    %v23 = vld [vmem:[%s0 + $0x8] sm:$0xff]
    %v24 = vld [vmem:[%s0 + $0x10] sm:$0xff]
    %v25 = vld [vmem:[%s0 + $0x18] sm:$0xff]
    %v26 = vld [vmem:[%s0 + $0x20] sm:$0xff]
    %v27 = vld [vmem:[%s0 + $0x28] sm:$0xff]
    %v28 = vld [vmem:[%s0 + $0x30] sm:$0xff]
    %v29 = vld [vmem:[%s0 + $0x38] sm:$0xff]
    %v30 = vld [vmem:[%s0 + $0x40] sm:$0xff]
    %v31 = vld [vmem:[%s0 + $0x48] sm:$0xff]
    %v32 = vld [vmem:[%s0 + $0x50] sm:$0xff]
    %v33 = vld [vmem:[%s0 + $0x58] sm:$0xff]
    %v34 = vld [vmem:[%s0 + $0x60] sm:$0xff]
    %v35 = vld [vmem:[%s0 + $0x68] sm:$0xff]
    %v36 = vld [vmem:[%s0 + $0x70] sm:$0xff]
    %v37 = vld [vmem:[%s0 + $0x78] sm:$0xff]
    %v38 = vld [vmem:[%s1] sm:$0xff]
    %vm39 = vcmask 64512
    %v41 = vsel %vm39, %v22, 0
    %v44 = vsel %vm39, %v23, 0
    %v47 = vsel %vm39, %v24, 0
    %v50 = vsel %vm39, %v25, 0
    %v53 = vsel %vm39, %v26, 0
    %v56 = vsel %vm39, %v27, 0
    %v59 = vsel %vm39, %v28, 0
    %v62 = vsel %vm39, %v29, 0
    %v65 = vsel %vm39, %v30, 0
    %v68 = vsel %vm39, %v31, 0
    %v71 = vsel %vm39, %v32, 0
    %v74 = vsel %vm39, %v33, 0
    %v77 = vsel %vm39, %v34, 0
    %v80 = vsel %vm39, %v35, 0
    %v83 = vsel %vm39, %v36, 0
    %v86 = vsel %vm39, %v37, 0
    %88 = vmatprep.subr.mxu0 0.0
    %89 = vmatpush1.msra.mxu0 %v38
    %90 = vmatprep.subr.mxu0 0.0
    %91 = vmatpush1.msra.mxu0 0.0
    %92 = vmatprep.subr.mxu0 0.0
    %93 = vmatpush1.msra.mxu0 0.0
    %94 = vmatprep.subr.mxu0 0.0
    %95 = vmatpush1.msra.mxu0 0.0
    %96 = vmatprep.subr.mxu0 0.0
    %97 = vmatpush1.msra.mxu0 0.0
    %98 = vmatprep.subr.mxu0 0.0
    %99 = vmatpush1.msra.mxu0 0.0
    %100 = vmatprep.subr.mxu0 0.0
    %101 = vmatpush1.msra.mxu0 0.0
    %102 = vmatprep.subr.mxu0 0.0
    %103 = vmatpush1.msra.mxu0 0.0
    %104 = vmatprep.subr.mxu0 0.0
    %105 = vmatpush1.msra.mxu0 0.0
    %106 = vmatprep.subr.mxu0 0.0
    %107 = vmatpush1.msra.mxu0 0.0
    %108 = vmatprep.subr.mxu0 0.0
    %109 = vmatpush1.msra.mxu0 0.0
    %110 = vmatprep.subr.mxu0 0.0
    %111 = vmatpush1.msra.mxu0 0.0
    %112 = vmatprep.subr.mxu0 0.0
    %113 = vmatpush1.msra.mxu0 0.0
    %114 = vmatprep.subr.mxu0 0.0
    %115 = vmatpush1.msra.mxu0 0.0
    %116 = vmatprep.subr.mxu0 0.0
    %117 = vmatpush1.msra.mxu0 0.0
    %118 = vmatprep.subr.mxu0 0.0
    %119 = vmatpush1.msra.mxu0 0.0
    %120 = vmatprep.subr.mxu0 0.0
    %121 = vmatpush1.msra.mxu0 0.0
    %122 = vmatprep.subr.mxu0 0.0
    %123 = vmatpush1.msra.mxu0 0.0
    %124 = vmatprep.subr.mxu0 0.0
    %125 = vmatpush1.msra.mxu0 0.0
    %126 = vmatprep.subr.mxu0 0.0
    %127 = vmatpush1.msra.mxu0 0.0
    %128 = vmatprep.subr.mxu0 0.0
    %129 = vmatpush1.msra.mxu0 0.0
    %130 = vmatprep.subr.mxu0 0.0
    %131 = vmatpush1.msra.mxu0 0.0
    %132 = vmatprep.subr.mxu0 0.0
    %133 = vmatpush1.msra.mxu0 0.0
    %134 = vmatprep.subr.mxu0 0.0
    %135 = vmatpush1.msra.mxu0 0.0
    %136 = vmatprep.subr.mxu0 0.0
    %137 = vmatpush1.msra.mxu0 0.0
    %138 = vmatprep.subr.mxu0 0.0
    %139 = vmatpush1.msra.mxu0 0.0
    %140 = vmatprep.subr.mxu0 0.0
    %141 = vmatpush1.msra.mxu0 0.0
    %142 = vmatprep.subr.mxu0 0.0
    %143 = vmatpush1.msra.mxu0 0.0
    %144 = vmatprep.subr.mxu0 0.0
    %145 = vmatpush1.msra.mxu0 0.0
    %146 = vmatprep.subr.mxu0 0.0
    %147 = vmatpush1.msra.mxu0 0.0
    %148 = vmatprep.subr.mxu0 0.0
    %149 = vmatpush1.msra.mxu0 0.0
    %150 = vmatprep.subr.mxu0 0.0
    %151 = vmatpush1.msra.mxu0 0.0
    %152 = vmatprep.mubr.f32.mxu0 0.0
    %153 = vmatmul.mubr.f32.gmra.mrb[0].mxu0 %v41
    %v154 = vpop.f32.mrb[0].mxu0
    %v155 = vadd.f32 0.0, %v154
    %v156 = vpop.f32.mrb[0].mxu0
    %157 = vmatprep.mubr.f32.mxu0 0.0
    %158 = vmatmul.mubr.f32.gmra.mrb[0].mxu0 %v44
    %v159 = vpop.f32.mrb[0].mxu0
    %v160 = vadd.f32 0.0, %v159
    %v161 = vpop.f32.mrb[0].mxu0
    %162 = vmatprep.mubr.f32.mxu0 0.0
    %163 = vmatmul.mubr.f32.gmra.mrb[0].mxu0 %v47
    %v164 = vpop.f32.mrb[0].mxu0
    %v165 = vadd.f32 0.0, %v164
    %v166 = vpop.f32.mrb[0].mxu0
    %167 = vmatprep.mubr.f32.mxu0 0.0
    %168 = vmatmul.mubr.f32.gmra.mrb[0].mxu0 %v50
    %v169 = vpop.f32.mrb[0].mxu0
    %v170 = vadd.f32 0.0, %v169
    %v171 = vpop.f32.mrb[0].mxu0
    %172 = vmatprep.mubr.f32.mxu0 0.0
    %173 = vmatmul.mubr.f32.gmra.mrb[0].mxu0 %v53
    %v174 = vpop.f32.mrb[0].mxu0
    %v175 = vadd.f32 0.0, %v174
    %v176 = vpop.f32.mrb[0].mxu0
    %177 = vmatprep.mubr.f32.mxu0 0.0
    %178 = vmatmul.mubr.f32.gmra.mrb[0].mxu0 %v56
    %v179 = vpop.f32.mrb[0].mxu0
    %v180 = vadd.f32 0.0, %v179
    %v181 = vpop.f32.mrb[0].mxu0
    %182 = vmatprep.mubr.f32.mxu0 0.0
    %183 = vmatmul.mubr.f32.gmra.mrb[0].mxu0 %v59
    %v184 = vpop.f32.mrb[0].mxu0
    %v185 = vadd.f32 0.0, %v184
    %v186 = vpop.f32.mrb[0].mxu0
    %187 = vmatprep.mubr.f32.mxu0 0.0
    %188 = vmatmul.mubr.f32.gmra.mrb[0].mxu0 %v62
    %v189 = vpop.f32.mrb[0].mxu0
    %v190 = vadd.f32 0.0, %v189
    %v191 = vpop.f32.mrb[0].mxu0
    %192 = vmatprep.mubr.f32.mxu0 0.0
    %193 = vmatmul.mubr.f32.gmra.mrb[0].mxu0 %v65
    %v194 = vpop.f32.mrb[0].mxu0
    %v195 = vadd.f32 0.0, %v194
    %v196 = vpop.f32.mrb[0].mxu0
    %197 = vmatprep.mubr.f32.mxu0 0.0
    %198 = vmatmul.mubr.f32.gmra.mrb[0].mxu0 %v68
    %v199 = vpop.f32.mrb[0].mxu0
    %v200 = vadd.f32 0.0, %v199
    %v201 = vpop.f32.mrb[0].mxu0
    %202 = vmatprep.mubr.f32.mxu0 0.0
    %203 = vmatmul.mubr.f32.gmra.mrb[0].mxu0 %v71
    %v204 = vpop.f32.mrb[0].mxu0
    %v205 = vadd.f32 0.0, %v204
    %v206 = vpop.f32.mrb[0].mxu0
    %207 = vmatprep.mubr.f32.mxu0 0.0
    %208 = vmatmul.mubr.f32.gmra.mrb[0].mxu0 %v74
    %v209 = vpop.f32.mrb[0].mxu0
    %v210 = vadd.f32 0.0, %v209
    %v211 = vpop.f32.mrb[0].mxu0
    %212 = vmatprep.mubr.f32.mxu0 0.0
    %213 = vmatmul.mubr.f32.gmra.mrb[0].mxu0 %v77
    %v214 = vpop.f32.mrb[0].mxu0
    %v215 = vadd.f32 0.0, %v214
    %v216 = vpop.f32.mrb[0].mxu0
    %217 = vmatprep.mubr.f32.mxu0 0.0
    %218 = vmatmul.mubr.f32.gmra.mrb[0].mxu0 %v80
    %v219 = vpop.f32.mrb[0].mxu0
    %v220 = vadd.f32 0.0, %v219
    %v221 = vpop.f32.mrb[0].mxu0
    %222 = vmatprep.mubr.f32.mxu0 0.0
    %223 = vmatmul.mubr.f32.gmra.mrb[0].mxu0 %v83
    %v224 = vpop.f32.mrb[0].mxu0
    %v225 = vadd.f32 0.0, %v224
    %v226 = vpop.f32.mrb[0].mxu0
    %227 = vmatprep.mubr.f32.mxu0 0.0
    %228 = vmatmul.mubr.f32.gmra.mrb[0].mxu0 %v86
    %v229 = vpop.f32.mrb[0].mxu0
    %v230 = vadd.f32 0.0, %v229
    %v231 = vpop.f32.mrb[0].mxu0
    %232 = vdwg.mxu0
    %v233 = vmul.f32 %v155, 0.70710677
    %v234 = vmul.f32 %v160, 0.70710677
    %v235 = vmul.f32 %v165, 0.70710677
    %v236 = vmul.f32 %v170, 0.70710677
    %v237 = vmul.f32 %v175, 0.70710677
    %v238 = vmul.f32 %v180, 0.70710677
    %v239 = vmul.f32 %v185, 0.70710677
    %v240 = vmul.f32 %v190, 0.70710677
    %v241 = vmul.f32 %v195, 0.70710677
    %v242 = vmul.f32 %v200, 0.70710677
    %v243 = vmul.f32 %v205, 0.70710677
    %v244 = vmul.f32 %v210, 0.70710677
    %v245 = vmul.f32 %v215, 0.70710677
    %v246 = vmul.f32 %v220, 0.70710677
    %v247 = vmul.f32 %v225, 0.70710677
    %v248 = vmul.f32 %v230, 0.70710677
    %249 = vst [vmem:[#allocation2] sm:$0xff] %v233
    %250 = vst [vmem:[#allocation2 + $0x8] sm:$0xff] %v234
    %251 = vst [vmem:[#allocation2 + $0x10] sm:$0xff] %v235
    %252 = vst [vmem:[#allocation2 + $0x18] sm:$0xff] %v236
    %253 = vst [vmem:[#allocation2 + $0x20] sm:$0xff] %v237
    %254 = vst [vmem:[#allocation2 + $0x28] sm:$0xff] %v238
    %255 = vst [vmem:[#allocation2 + $0x30] sm:$0xff] %v239
    %256 = vst [vmem:[#allocation2 + $0x38] sm:$0xff] %v240
    %257 = vst [vmem:[#allocation2 + $0x40] sm:$0xff] %v241
    %258 = vst [vmem:[#allocation2 + $0x48] sm:$0xff] %v242
    %259 = vst [vmem:[#allocation2 + $0x50] sm:$0xff] %v243
    %260 = vst [vmem:[#allocation2 + $0x58] sm:$0xff] %v244
    %261 = vst [vmem:[#allocation2 + $0x60] sm:$0xff] %v245
    %262 = vst [vmem:[#allocation2 + $0x68] sm:$0xff] %v246
    %263 = vst [vmem:[#allocation2 + $0x70] sm:$0xff] %v247
    %264 = vst [vmem:[#allocation2 + $0x78] sm:$0xff] %v248
    %v265 = vld [vmem:[%s2] sm:$0xff]
    %266 = vmatprep.subr.mxu0 0.0
    %267 = vmatpush1.msra.mxu0 %v265
    %268 = vmatprep.subr.mxu0 0.0
    %269 = vmatpush1.msra.mxu0 0.0
    %270 = vmatprep.subr.mxu0 0.0
    %271 = vmatpush1.msra.mxu0 0.0
    %272 = vmatprep.subr.mxu0 0.0
    %273 = vmatpush1.msra.mxu0 0.0
    %274 = vmatprep.subr.mxu0 0.0
    %275 = vmatpush1.msra.mxu0 0.0
    %276 = vmatprep.subr.mxu0 0.0
    %277 = vmatpush1.msra.mxu0 0.0
    %278 = vmatprep.subr.mxu0 0.0
    %279 = vmatpush1.msra.mxu0 0.0
    %280 = vmatprep.subr.mxu0 0.0
    %281 = vmatpush1.msra.mxu0 0.0
    %282 = vmatprep.subr.mxu0 0.0
    %283 = vmatpush1.msra.mxu0 0.0
    %284 = vmatprep.subr.mxu0 0.0
    %285 = vmatpush1.msra.mxu0 0.0
    %286 = vmatprep.subr.mxu0 0.0
    %287 = vmatpush1.msra.mxu0 0.0
    %288 = vmatprep.subr.mxu0 0.0
    %289 = vmatpush1.msra.mxu0 0.0
    %290 = vmatprep.subr.mxu0 0.0
    %291 = vmatpush1.msra.mxu0 0.0
    %292 = vmatprep.subr.mxu0 0.0
    %293 = vmatpush1.msra.mxu0 0.0
    %294 = vmatprep.subr.mxu0 0.0
    %295 = vmatpush1.msra.mxu0 0.0
    %296 = vmatprep.subr.mxu0 0.0
    %297 = vmatpush1.msra.mxu0 0.0
    %298 = vmatprep.subr.mxu0 0.0
    %299 = vmatpush1.msra.mxu0 0.0
    %300 = vmatprep.subr.mxu0 0.0
    %301 = vmatpush1.msra.mxu0 0.0
    %302 = vmatprep.subr.mxu0 0.0
    %303 = vmatpush1.msra.mxu0 0.0
    %304 = vmatprep.subr.mxu0 0.0
    %305 = vmatpush1.msra.mxu0 0.0
    %306 = vmatprep.subr.mxu0 0.0
    %307 = vmatpush1.msra.mxu0 0.0
    %308 = vmatprep.subr.mxu0 0.0
    %309 = vmatpush1.msra.mxu0 0.0
    %310 = vmatprep.subr.mxu0 0.0
    %311 = vmatpush1.msra.mxu0 0.0
    %312 = vmatprep.subr.mxu0 0.0
    %313 = vmatpush1.msra.mxu0 0.0
    %314 = vmatprep.subr.mxu0 0.0
    %315 = vmatpush1.msra.mxu0 0.0
    %316 = vmatprep.subr.mxu0 0.0
    %317 = vmatpush1.msra.mxu0 0.0
    %318 = vmatprep.subr.mxu0 0.0
    %319 = vmatpush1.msra.mxu0 0.0
    %320 = vmatprep.subr.mxu0 0.0
    %321 = vmatpush1.msra.mxu0 0.0
    %322 = vmatprep.subr.mxu0 0.0
    %323 = vmatpush1.msra.mxu0 0.0
    %324 = vmatprep.subr.mxu0 0.0
    %325 = vmatpush1.msra.mxu0 0.0
    %326 = vmatprep.subr.mxu0 0.0
    %327 = vmatpush1.msra.mxu0 0.0
    %328 = vmatprep.subr.mxu0 0.0
    %329 = vmatpush1.msra.mxu0 0.0
    %330 = vmatprep.mubr.f32.mxu0 0.0
    %331 = vmatmul.mubr.f32.gmra.mrb[0].mxu0 %v41
    %v332 = vpop.f32.mrb[0].mxu0
    %v333 = vadd.f32 0.0, %v332
    %v334 = vpop.f32.mrb[0].mxu0
    %335 = vmatprep.mubr.f32.mxu0 0.0
    %336 = vmatmul.mubr.f32.gmra.mrb[0].mxu0 %v44
    %v337 = vpop.f32.mrb[0].mxu0
    %v338 = vadd.f32 0.0, %v337
    %v339 = vpop.f32.mrb[0].mxu0
    %340 = vmatprep.mubr.f32.mxu0 0.0
    %341 = vmatmul.mubr.f32.gmra.mrb[0].mxu0 %v47
    %v342 = vpop.f32.mrb[0].mxu0
    %v343 = vadd.f32 0.0, %v342
    %v344 = vpop.f32.mrb[0].mxu0
    %345 = vmatprep.mubr.f32.mxu0 0.0
    %346 = vmatmul.mubr.f32.gmra.mrb[0].mxu0 %v50
    %v347 = vpop.f32.mrb[0].mxu0
    %v348 = vadd.f32 0.0, %v347
    %v349 = vpop.f32.mrb[0].mxu0
    %350 = vmatprep.mubr.f32.mxu0 0.0
    %351 = vmatmul.mubr.f32.gmra.mrb[0].mxu0 %v53
    %v352 = vpop.f32.mrb[0].mxu0
    %v353 = vadd.f32 0.0, %v352
    %v354 = vpop.f32.mrb[0].mxu0
    %355 = vmatprep.mubr.f32.mxu0 0.0
    %356 = vmatmul.mubr.f32.gmra.mrb[0].mxu0 %v56
    %v357 = vpop.f32.mrb[0].mxu0
    %v358 = vadd.f32 0.0, %v357
    %v359 = vpop.f32.mrb[0].mxu0
    %360 = vmatprep.mubr.f32.mxu0 0.0
    %361 = vmatmul.mubr.f32.gmra.mrb[0].mxu0 %v59
    %v362 = vpop.f32.mrb[0].mxu0
    %v363 = vadd.f32 0.0, %v362
    %v364 = vpop.f32.mrb[0].mxu0
    %365 = vmatprep.mubr.f32.mxu0 0.0
    %366 = vmatmul.mubr.f32.gmra.mrb[0].mxu0 %v62
    %v367 = vpop.f32.mrb[0].mxu0
    %v368 = vadd.f32 0.0, %v367
    %v369 = vpop.f32.mrb[0].mxu0
    %370 = vmatprep.mubr.f32.mxu0 0.0
    %371 = vmatmul.mubr.f32.gmra.mrb[0].mxu0 %v65
    %v372 = vpop.f32.mrb[0].mxu0
    %v373 = vadd.f32 0.0, %v372
    %v374 = vpop.f32.mrb[0].mxu0
    %375 = vmatprep.mubr.f32.mxu0 0.0
    %376 = vmatmul.mubr.f32.gmra.mrb[0].mxu0 %v68
    %v377 = vpop.f32.mrb[0].mxu0
    %v378 = vadd.f32 0.0, %v377
    %v379 = vpop.f32.mrb[0].mxu0
    %380 = vmatprep.mubr.f32.mxu0 0.0
    %381 = vmatmul.mubr.f32.gmra.mrb[0].mxu0 %v71
    %v382 = vpop.f32.mrb[0].mxu0
    %v383 = vadd.f32 0.0, %v382
    %v384 = vpop.f32.mrb[0].mxu0
    %385 = vmatprep.mubr.f32.mxu0 0.0
    %386 = vmatmul.mubr.f32.gmra.mrb[0].mxu0 %v74
    %v387 = vpop.f32.mrb[0].mxu0
    %v388 = vadd.f32 0.0, %v387
    %v389 = vpop.f32.mrb[0].mxu0
    %390 = vmatprep.mubr.f32.mxu0 0.0
    %391 = vmatmul.mubr.f32.gmra.mrb[0].mxu0 %v77
    %v392 = vpop.f32.mrb[0].mxu0
    %v393 = vadd.f32 0.0, %v392
    %v394 = vpop.f32.mrb[0].mxu0
    %395 = vmatprep.mubr.f32.mxu0 0.0
    %396 = vmatmul.mubr.f32.gmra.mrb[0].mxu0 %v80
    %v397 = vpop.f32.mrb[0].mxu0
    %v398 = vadd.f32 0.0, %v397
    %v399 = vpop.f32.mrb[0].mxu0
    %400 = vmatprep.mubr.f32.mxu0 0.0
    %401 = vmatmul.mubr.f32.gmra.mrb[0].mxu0 %v83
    %v402 = vpop.f32.mrb[0].mxu0
    %v403 = vadd.f32 0.0, %v402
    %v404 = vpop.f32.mrb[0].mxu0
    %405 = vmatprep.mubr.f32.mxu0 0.0
    %406 = vmatmul.mubr.f32.gmra.mrb[0].mxu0 %v86
    %v407 = vpop.f32.mrb[0].mxu0
    %v408 = vadd.f32 0.0, %v407
    %v409 = vpop.f32.mrb[0].mxu0
    %410 = vdwg.mxu0
    %411 = vst [vmem:[#allocation4] sm:$0xff] %v333
    %412 = vst [vmem:[#allocation4 + $0x8] sm:$0xff] %v338
    %413 = vst [vmem:[#allocation4 + $0x10] sm:$0xff] %v343
    %414 = vst [vmem:[#allocation4 + $0x18] sm:$0xff] %v348
    %415 = vst [vmem:[#allocation4 + $0x20] sm:$0xff] %v353
    %416 = vst [vmem:[#allocation4 + $0x28] sm:$0xff] %v358
    %417 = vst [vmem:[#allocation4 + $0x30] sm:$0xff] %v363
    %418 = vst [vmem:[#allocation4 + $0x38] sm:$0xff] %v368
    %419 = vst [vmem:[#allocation4 + $0x40] sm:$0xff] %v373
    %420 = vst [vmem:[#allocation4 + $0x48] sm:$0xff] %v378
    %421 = vst [vmem:[#allocation4 + $0x50] sm:$0xff] %v383
    %422 = vst [vmem:[#allocation4 + $0x58] sm:$0xff] %v388
    %423 = vst [vmem:[#allocation4 + $0x60] sm:$0xff] %v393
    %424 = vst [vmem:[#allocation4 + $0x68] sm:$0xff] %v398
    %425 = vst [vmem:[#allocation4 + $0x70] sm:$0xff] %v403
    %426 = vst [vmem:[#allocation4 + $0x78] sm:$0xff] %v408
    %v427 = vld [vmem:[%s3] sm:$0xff]
    %428 = vmatprep.subr.mxu0 0.0
    %429 = vmatpush1.msra.mxu0 %v427
    %430 = vmatprep.subr.mxu0 0.0
    %431 = vmatpush1.msra.mxu0 0.0
    %432 = vmatprep.subr.mxu0 0.0
    %433 = vmatpush1.msra.mxu0 0.0
    %434 = vmatprep.subr.mxu0 0.0
    %435 = vmatpush1.msra.mxu0 0.0
    %436 = vmatprep.subr.mxu0 0.0
    %437 = vmatpush1.msra.mxu0 0.0
    %438 = vmatprep.subr.mxu0 0.0
    %439 = vmatpush1.msra.mxu0 0.0
    %440 = vmatprep.subr.mxu0 0.0
    %441 = vmatpush1.msra.mxu0 0.0
    %442 = vmatprep.subr.mxu0 0.0
    %443 = vmatpush1.msra.mxu0 0.0
    %444 = vmatprep.subr.mxu0 0.0
    %445 = vmatpush1.msra.mxu0 0.0
    %446 = vmatprep.subr.mxu0 0.0
    %447 = vmatpush1.msra.mxu0 0.0
    %448 = vmatprep.subr.mxu0 0.0
    %449 = vmatpush1.msra.mxu0 0.0
    %450 = vmatprep.subr.mxu0 0.0
    %451 = vmatpush1.msra.mxu0 0.0
    %452 = vmatprep.subr.mxu0 0.0
    %453 = vmatpush1.msra.mxu0 0.0
    %454 = vmatprep.subr.mxu0 0.0
    %455 = vmatpush1.msra.mxu0 0.0
    %456 = vmatprep.subr.mxu0 0.0
    %457 = vmatpush1.msra.mxu0 0.0
    %458 = vmatprep.subr.mxu0 0.0
    %459 = vmatpush1.msra.mxu0 0.0
    %460 = vmatprep.subr.mxu0 0.0
    %461 = vmatpush1.msra.mxu0 0.0
    %462 = vmatprep.subr.mxu0 0.0
    %463 = vmatpush1.msra.mxu0 0.0
    %464 = vmatprep.subr.mxu0 0.0
    %465 = vmatpush1.msra.mxu0 0.0
    %466 = vmatprep.subr.mxu0 0.0
    %467 = vmatpush1.msra.mxu0 0.0
    %468 = vmatprep.subr.mxu0 0.0
    %469 = vmatpush1.msra.mxu0 0.0
    %470 = vmatprep.subr.mxu0 0.0
    %471 = vmatpush1.msra.mxu0 0.0
    %472 = vmatprep.subr.mxu0 0.0
    %473 = vmatpush1.msra.mxu0 0.0
    %474 = vmatprep.subr.mxu0 0.0
    %475 = vmatpush1.msra.mxu0 0.0
    %476 = vmatprep.subr.mxu0 0.0
    %477 = vmatpush1.msra.mxu0 0.0
    %478 = vmatprep.subr.mxu0 0.0
    %479 = vmatpush1.msra.mxu0 0.0
    %480 = vmatprep.subr.mxu0 0.0
    %481 = vmatpush1.msra.mxu0 0.0
    %482 = vmatprep.subr.mxu0 0.0
    %483 = vmatpush1.msra.mxu0 0.0
    %484 = vmatprep.subr.mxu0 0.0
    %485 = vmatpush1.msra.mxu0 0.0
    %486 = vmatprep.subr.mxu0 0.0
    %487 = vmatpush1.msra.mxu0 0.0
    %488 = vmatprep.subr.mxu0 0.0
    %489 = vmatpush1.msra.mxu0 0.0
    %490 = vmatprep.subr.mxu0 0.0
    %491 = vmatpush1.msra.mxu0 0.0
    %492 = vmatprep.mubr.f32.mxu0 0.0
    %493 = vmatmul.mubr.f32.gmra.mrb[0].mxu0 %v41
    %v494 = vpop.f32.mrb[0].mxu0
    %v495 = vadd.f32 0.0, %v494
    %v496 = vpop.f32.mrb[0].mxu0
    %497 = vmatprep.mubr.f32.mxu0 0.0
    %498 = vmatmul.mubr.f32.gmra.mrb[0].mxu0 %v44
    %v499 = vpop.f32.mrb[0].mxu0
    %v500 = vadd.f32 0.0, %v499
    %v501 = vpop.f32.mrb[0].mxu0
    %502 = vmatprep.mubr.f32.mxu0 0.0
    %503 = vmatmul.mubr.f32.gmra.mrb[0].mxu0 %v47
    %v504 = vpop.f32.mrb[0].mxu0
    %v505 = vadd.f32 0.0, %v504
    %v506 = vpop.f32.mrb[0].mxu0
    %507 = vmatprep.mubr.f32.mxu0 0.0
    %508 = vmatmul.mubr.f32.gmra.mrb[0].mxu0 %v50
    %v509 = vpop.f32.mrb[0].mxu0
    %v510 = vadd.f32 0.0, %v509
    %v511 = vpop.f32.mrb[0].mxu0
    %512 = vmatprep.mubr.f32.mxu0 0.0
    %513 = vmatmul.mubr.f32.gmra.mrb[0].mxu0 %v53
    %v514 = vpop.f32.mrb[0].mxu0
    %v515 = vadd.f32 0.0, %v514
    %v516 = vpop.f32.mrb[0].mxu0
    %517 = vmatprep.mubr.f32.mxu0 0.0
    %518 = vmatmul.mubr.f32.gmra.mrb[0].mxu0 %v56
    %v519 = vpop.f32.mrb[0].mxu0
    %v520 = vadd.f32 0.0, %v519
    %v521 = vpop.f32.mrb[0].mxu0
    %522 = vmatprep.mubr.f32.mxu0 0.0
    %523 = vmatmul.mubr.f32.gmra.mrb[0].mxu0 %v59
    %v524 = vpop.f32.mrb[0].mxu0
    %v525 = vadd.f32 0.0, %v524
    %v526 = vpop.f32.mrb[0].mxu0
    %527 = vmatprep.mubr.f32.mxu0 0.0
    %528 = vmatmul.mubr.f32.gmra.mrb[0].mxu0 %v62
    %v529 = vpop.f32.mrb[0].mxu0
    %v530 = vadd.f32 0.0, %v529
    %v531 = vpop.f32.mrb[0].mxu0
    %532 = vmatprep.mubr.f32.mxu0 0.0
    %533 = vmatmul.mubr.f32.gmra.mrb[0].mxu0 %v65
    %v534 = vpop.f32.mrb[0].mxu0
    %v535 = vadd.f32 0.0, %v534
    %v536 = vpop.f32.mrb[0].mxu0
    %537 = vmatprep.mubr.f32.mxu0 0.0
    %538 = vmatmul.mubr.f32.gmra.mrb[0].mxu0 %v68
    %v539 = vpop.f32.mrb[0].mxu0
    %v540 = vadd.f32 0.0, %v539
    %v541 = vpop.f32.mrb[0].mxu0
    %542 = vmatprep.mubr.f32.mxu0 0.0
    %543 = vmatmul.mubr.f32.gmra.mrb[0].mxu0 %v71
    %v544 = vpop.f32.mrb[0].mxu0
    %v545 = vadd.f32 0.0, %v544
    %v546 = vpop.f32.mrb[0].mxu0
    %547 = vmatprep.mubr.f32.mxu0 0.0
    %548 = vmatmul.mubr.f32.gmra.mrb[0].mxu0 %v74
    %v549 = vpop.f32.mrb[0].mxu0
    %v550 = vadd.f32 0.0, %v549
    %v551 = vpop.f32.mrb[0].mxu0
    %552 = vmatprep.mubr.f32.mxu0 0.0
    %553 = vmatmul.mubr.f32.gmra.mrb[0].mxu0 %v77
    %v554 = vpop.f32.mrb[0].mxu0
    %v555 = vadd.f32 0.0, %v554
    %v556 = vpop.f32.mrb[0].mxu0
    %557 = vmatprep.mubr.f32.mxu0 0.0
    %558 = vmatmul.mubr.f32.gmra.mrb[0].mxu0 %v80
    %v559 = vpop.f32.mrb[0].mxu0
    %v560 = vadd.f32 0.0, %v559
    %v561 = vpop.f32.mrb[0].mxu0
    %562 = vmatprep.mubr.f32.mxu0 0.0
    %563 = vmatmul.mubr.f32.gmra.mrb[0].mxu0 %v83
    %v564 = vpop.f32.mrb[0].mxu0
    %v565 = vadd.f32 0.0, %v564
    %v566 = vpop.f32.mrb[0].mxu0
    %567 = vmatprep.mubr.f32.mxu0 0.0
    %568 = vmatmul.mubr.f32.gmra.mrb[0].mxu0 %v86
    %v569 = vpop.f32.mrb[0].mxu0
    %v570 = vadd.f32 0.0, %v569
    %v571 = vpop.f32.mrb[0].mxu0
    %572 = vdwg.mxu0
    %573 = vst [vmem:[#allocation6] sm:$0xff] %v495
    %574 = vst [vmem:[#allocation6 + $0x8] sm:$0xff] %v500
    %575 = vst [vmem:[#allocation6 + $0x10] sm:$0xff] %v505
    %576 = vst [vmem:[#allocation6 + $0x18] sm:$0xff] %v510
    %577 = vst [vmem:[#allocation6 + $0x20] sm:$0xff] %v515
    %578 = vst [vmem:[#allocation6 + $0x28] sm:$0xff] %v520
    %579 = vst [vmem:[#allocation6 + $0x30] sm:$0xff] %v525
    %580 = vst [vmem:[#allocation6 + $0x38] sm:$0xff] %v530
    %581 = vst [vmem:[#allocation6 + $0x40] sm:$0xff] %v535
    %582 = vst [vmem:[#allocation6 + $0x48] sm:$0xff] %v540
    %583 = vst [vmem:[#allocation6 + $0x50] sm:$0xff] %v545
    %584 = vst [vmem:[#allocation6 + $0x58] sm:$0xff] %v550
    %585 = vst [vmem:[#allocation6 + $0x60] sm:$0xff] %v555
    %586 = vst [vmem:[#allocation6 + $0x68] sm:$0xff] %v560
    %587 = vst [vmem:[#allocation6 + $0x70] sm:$0xff] %v565
    %588 = vst [vmem:[#allocation6 + $0x78] sm:$0xff] %v570
    // Predicated region
    $region18: #{tpu_custom_call.1} parent=1 // pred_check
      _
    $region19: #{tpu_custom_call.1} parent=1 // pred_check_branch
      %590 = sbr.rel (0) target = $region21
    $region20: #{tpu_custom_call.1} parent=1 // pred_region
      %s592 = ssub.s32 2048, 2048
      %593 = vsyncadd [#allocation3], %s592
      %s594 = sshll.u32 [#allocation2], 4
      %s595 = int_to_ptr.vmem [resolvable:$true] %s594
      %600 = dma.vmem_to_hbm [thread:$0]  %s595, 2048, %s4, [#allocation3], 128, 128, 8
    $region21: #{tpu_custom_call.1} parent=1 // pred_fallthru
      _
    // Predicated region
    $region22: #{tpu_custom_call.1} parent=1 // pred_check
      _
    $region23: #{tpu_custom_call.1} parent=1 // pred_check_branch
      %602 = sbr.rel (0) target = $region25
    $region24: #{tpu_custom_call.1} parent=1 // pred_region
      %s604 = ssub.s32 2048, 2048
      %605 = vsyncadd [#allocation5], %s604
      %s606 = sshll.u32 [#allocation4], 4
      %s607 = int_to_ptr.vmem [resolvable:$true] %s606
      %612 = dma.vmem_to_hbm [thread:$0]  %s607, 2048, %s5, [#allocation5], 128, 128, 8
    $region25: #{tpu_custom_call.1} parent=1 // pred_fallthru
      _
    // Predicated region
    $region26: #{tpu_custom_call.1} parent=1 // pred_check
      _
    $region27: #{tpu_custom_call.1} parent=1 // pred_check_branch
      %614 = sbr.rel (0) target = $region29
    $region28: #{tpu_custom_call.1} parent=1 // pred_region
      %s616 = ssub.s32 2048, 2048
      %617 = vsyncadd [#allocation5], %s616
      %s618 = sshll.u32 [#allocation6], 4
      %s619 = int_to_ptr.vmem [resolvable:$true] %s618
      %624 = dma.vmem_to_hbm [thread:$0]  %s619, 2048, %s6, [#allocation5], 128, 128, 8
    $region29: #{tpu_custom_call.1} parent=1 // pred_fallthru
      _
    // Predicated region
    $region30: #{tpu_custom_call.1} parent=1 // pred_check
      _
    $region31: #{tpu_custom_call.1} parent=1 // pred_check_branch
      %626 = sbr.rel (0) target = $region33
    $region32: #{tpu_custom_call.1} parent=1 // pred_region
      %627 = dma.done [#allocation3], 2048
    $region33: #{tpu_custom_call.1} parent=1 // pred_fallthru
      _
    // Predicated region
    $region34: #{tpu_custom_call.1} parent=1 // pred_check
      _
    $region35: #{tpu_custom_call.1} parent=1 // pred_check_branch
      %629 = sbr.rel (0) target = $region37
    $region36: #{tpu_custom_call.1} parent=1 // pred_region
      %630 = dma.done [#allocation5], 2048
    $region37: #{tpu_custom_call.1} parent=1 // pred_fallthru
      _
    // Predicated region
    $region38: #{tpu_custom_call.1} parent=1 // pred_check
      _
    $region39: #{tpu_custom_call.1} parent=1 // pred_check_branch
      %632 = sbr.rel (0) target = $region41
    $region40: #{tpu_custom_call.1} parent=1 // pred_region
      %633 = dma.done [#allocation5], 2048
    $region41: #{tpu_custom_call.1} parent=1 // pred_fallthru
      _
    %634 = vsyncpa [#allocation3], 1
    %635 = vsyncpa [#allocation5], 1

</llo_original>
